<compile_context>
chip_gen: v6e
topology: v6e:2x2x1
jax: 0.10.0
libtpu: 0.0.40
codegen_flags: <defaults>
</compile_context>

<pallas_src>
import numpy as np
import jax
import jax.numpy as jnp
from jax.experimental import pallas as pl
from jax.experimental.pallas import tpu as pltpu

WEIGHT_REGULARIZER = 1e-6
DROPOUT_REGULARIZER = 1e-5
EPS = 1e-7
TEMP = 0.1


def _concrete_dropout_linear_kernel(scalars_ref, x_ref, u_ref, w_ref, b_ref,
                                    out_ref, xd_ref):
    # scalars_ref (SMEM f32[2]):
    #   [0] c10 = ((p + eps) / (1 - p + eps)) ** 10
    #   [1] 1 / (1 - p)                (reciprocal of the retain probability)

    # Compute the concrete-dropout mask and dropped activations once per batch
    # tile (j == 0); they are reused for every Dout tile of the same batch tile.
    @pl.when(pl.program_id(1) == 0)
    def _():
        c10 = scalars_ref[0]
        inv_retain = scalars_ref[1]
        u = u_ref[...]
        a = u + EPS                      # u + eps
        bm = (1.0 - u) + EPS             # 1 - u + eps
        # random_tensor = 1 - sigmoid(z/temp), 1/temp == 10 exactly:
        #   == bm^10 / (bm^10 + c^10 * a^10)      (pure VPU math, one divide)
        a2 = a * a
        a4 = a2 * a2
        a8 = a4 * a4
        a10 = a8 * a2
        b2 = bm * bm
        b4 = b2 * b2
        b8 = b4 * b4
        b10 = b8 * b2
        random_tensor = b10 / (b10 + c10 * a10)
        xd_ref[...] = (x_ref[...] * (random_tensor * inv_retain)
                       ).astype(xd_ref.dtype)

    # The wrapped layer: Linear on the MXU (bf16 operands, f32 accumulation).
    out_ref[...] = (jnp.dot(xd_ref[...], w_ref[...],
                            preferred_element_type=jnp.float32)
                    + b_ref[...]).astype(out_ref.dtype)


def _vmem_cap_bytes():
    # v5e / v6e have 128 MiB of VMEM per core, v7x only 64 MiB.  Leave headroom
    # for Mosaic internal scratch in both cases.
    try:
        kind = jax.devices()[0].device_kind.lower()
    except Exception:
        kind = ""
    if ("v5" in kind) or ("v6" in kind):
        return 100 * 1024 * 1024
    return 56 * 1024 * 1024


def concrete_dropout_linear(x, p_logit, w, b, noise, *, block_b=512,
                            block_n=1024):
    """Forward of _ConcreteDropout wrapping a Linear layer.

    x:       [B, Din]  f32
    p_logit: [1]       f32   (the module's learnable dropout logit)
    w:       [Din, Dout] f32 (Linear weight, pre-transposed)
    b:       [1, Dout] f32   (Linear bias)
    noise:   [B, Din]  f32 uniform in [0, 1)  (torch.rand_like equivalent)

    Returns (out [B, Dout] f32, regularization scalar f32).
    """
    B, Din = x.shape
    Din_w, Dout = w.shape
    assert Din_w == Din
    assert noise.shape == (B, Din)

    # ---- batch tile: multiple of 8 sublanes; prefer >= ~8 grid steps --------
    tb = int(min(block_b, B))
    if B >= 64 and B // tb < 8:
        tb = B // 8
    tb = max(8, (tb // 8) * 8)
    Bp = ((B + tb - 1) // tb) * tb
    if Bp != B:
        x = jnp.pad(x, ((0, Bp - B), (0, 0)))
        noise = jnp.pad(noise, ((0, Bp - B), (0, 0)))

    # ---- Dout tile: full Dout if it fits, else a 128-multiple divisor -------
    tn = Dout
    if Dout > block_n and Dout % 128 == 0:
        step = max(128, (block_n // 128) * 128)
        for cand in range(step, 0, -128):
            if Dout % cand == 0:
                tn = cand
                break
    grid = (Bp // tb, Dout // tn)

    # ---- scalar glue on the 1-element parameter (plain JAX) -----------------
    p = jax.nn.sigmoid(p_logit.astype(jnp.float32))[0]
    inv_retain = 1.0 / (1.0 - p)
    c10 = ((p + EPS) / (1.0 - p + EPS)) ** 10
    scalars = jnp.stack([c10, inv_retain]).astype(jnp.float32)

    # ---- regularizer: batch-independent, computed once (not per tile) -------
    sos = jnp.sum(w.astype(jnp.float32) ** 2) + jnp.sum(b.astype(jnp.float32) ** 2)
    weights_regularizer = WEIGHT_REGULARIZER * sos * inv_retain
    dropout_regularizer = (p * jnp.log(p) + (1.0 - p) * jnp.log(1.0 - p)) \
        * (DROPOUT_REGULARIZER * float(Din))          # input_dim = x[0].numel()
    reg = weights_regularizer + dropout_regularizer

    # bf16 weight copy for the MXU (halves HBM bytes and VMEM residency).
    w_bf = w.astype(jnp.bfloat16)

    cost = pl.CostEstimate(
        flops=2 * Bp * Din * Dout,
        transcendentals=Bp * Din,                     # one divide per element
        bytes_accessed=(2 * Bp * Din * 4              # x + noise
                        + Din * Dout * 2 + Dout * 4   # W (bf16) + b
                        + Bp * Dout * 4))             # out

    # VMEM footprint: double-buffered x/noise/out/W/b tiles + xd scratch.
    est = (2 * tb * Din * 4 * 2       # x + noise tiles, double-buffered
           + 2 * tb * tn * 4          # out tile
           + 2 * Din * tn * 2         # W tile (bf16)
           + 2 * tn * 4               # bias tile
           + tb * Din * 2)            # xd scratch (bf16)
    vmem_limit = min(max(2 * est, 32 * 1024 * 1024), _vmem_cap_bytes())

    out = pl.pallas_call(
        _concrete_dropout_linear_kernel,
        grid=grid,
        out_shape=jax.ShapeDtypeStruct((Bp, Dout), jnp.float32),
        in_specs=[
            pl.BlockSpec(memory_space=pltpu.MemorySpace.SMEM),   # scalars f32[2]
            pl.BlockSpec((tb, Din), lambda i, j: (i, 0)),        # x tile
            pl.BlockSpec((tb, Din), lambda i, j: (i, 0)),        # noise tile
            pl.BlockSpec((Din, tn), lambda i, j: (0, j)),        # W tile (bf16)
            pl.BlockSpec((1, tn), lambda i, j: (0, j)),          # bias tile
        ],
        out_specs=pl.BlockSpec((tb, tn), lambda i, j: (i, j)),
        scratch_shapes=[pltpu.VMEM((tb, Din), jnp.bfloat16)],    # dropped x
        compiler_params=pltpu.CompilerParams(
            dimension_semantics=("parallel", "arbitrary"),
            vmem_limit_bytes=vmem_limit),
        cost_estimate=cost,
    )(scalars, x, noise, w_bf, b)

    return out[:B], reg


# ---------------------------------------------------------------------------
# Pure-JAX references for validation
# ---------------------------------------------------------------------------
def reference(x, noise, p_logit, w, b):
    """Exact mirror of the PyTorch forward (f32 everywhere, log/sigmoid form)."""
    p = jax.nn.sigmoid(p_logit.astype(jnp.float32))[0]
    drop_prob = jax.nn.sigmoid(
        (jnp.log(p + EPS) - jnp.log(1.0 - p + EPS)
         + jnp.log(noise + EPS) - jnp.log(1.0 - noise + EPS)) / TEMP)
    xd = x * (1.0 - drop_prob) / (1.0 - p)
    out = xd @ w + b
    sos = jnp.sum(w ** 2) + jnp.sum(b ** 2)
    w_reg = WEIGHT_REGULARIZER * sos / (1.0 - p)
    d_reg = (p * jnp.log(p) + (1.0 - p) * jnp.log(1.0 - p)) \
        * DROPOUT_REGULARIZER * x.shape[1]
    return out, w_reg + d_reg


def reference_precision_matched(x, noise, p_logit, w, b):
    """Same math as the kernel (rational mask form + bf16 matmul, f32 accum)."""
    p = jax.nn.sigmoid(p_logit.astype(jnp.float32))[0]
    c10 = ((p + EPS) / (1.0 - p + EPS)) ** 10
    a = noise + EPS
    bm = (1.0 - noise) + EPS
    random_tensor = bm ** 10 / (bm ** 10 + c10 * a ** 10)
    xd = x * random_tensor / (1.0 - p)
    return jnp.dot(xd.astype(jnp.bfloat16), w.astype(jnp.bfloat16),
                   preferred_element_type=jnp.float32) + b


if __name__ == "__main__":
    # Lane/MXU-dense demo shapes; B=256 with 32-row tiles gives an 8-step grid
    # (megacore split + pipelining per the perf review).
    B, D_IN, D_OUT = 256, 128, 128

    key = jax.random.PRNGKey(0)
    kx, kw, kb, kn = jax.random.split(key, 4)

    # deterministic parameter init: init_min == init_max == 0.1 -> logit(0.1)
    p_logit = jnp.array([np.log(0.1) - np.log(1.0 - 0.1)], dtype=jnp.float32)
    w = (jax.random.normal(kw, (D_IN, D_OUT), jnp.float32)
         * (1.0 / np.sqrt(D_IN)))
    b = jax.random.normal(kb, (1, D_OUT), jnp.float32) * 0.01
    x = jax.random.normal(kx, (B, D_IN), jnp.float32)
    # torch.rand_like equivalent: uniform noise in [0, 1)
    noise = jax.random.uniform(kn, (B, D_IN), jnp.float32)

    out, reg = concrete_dropout_linear(x, p_logit, w, b, noise)
    out = jax.block_until_ready(out)
    reg = jax.block_until_ready(reg)
    assert out.shape == (B, D_OUT)

    out_ref, reg_ref = reference(x, noise, p_logit, w, b)
    out_ref_pm = reference_precision_matched(x, noise, p_logit, w, b)

    # Tight check against a reference with the same precision choices.
    assert np.allclose(np.asarray(out), np.asarray(out_ref_pm),
                       rtol=2e-3, atol=2e-3)
    # Looser check against the exact f32 PyTorch-mirror (bf16 matmul error).
    assert np.allclose(np.asarray(out), np.asarray(out_ref),
                       rtol=3e-2, atol=3e-2)
    assert np.allclose(float(reg), float(reg_ref), rtol=1e-5, atol=1e-7)

    print("KERNEL_OK")
</pallas_src>

<mosaic_0001>
module attributes {stable_mosaic.version = 11 : i64} {
  func.func @_concrete_dropout_linear_kernel(%arg0: i32, %arg1: i32, %arg2: memref<2xf32, #tpu.memory_space<smem>>, %arg3: memref<32x128xf32, #tpu.memory_space<vmem>>, %arg4: memref<32x128xf32, #tpu.memory_space<vmem>>, %arg5: memref<128x128xbf16, #tpu.memory_space<vmem>>, %arg6: memref<1x128xf32, #tpu.memory_space<vmem>>, %arg7: memref<32x128xf32, #tpu.memory_space<vmem>>, %arg8: memref<32x128xbf16, #tpu.memory_space<vmem>>) attributes {dimension_semantics = [#tpu.dimension_semantics<parallel>, #tpu.dimension_semantics<arbitrary>], iteration_bounds = array<i64: 8, 1>, scalar_prefetch = 0 : i64, scratch_operands = 1 : i64, tpu.core_type = #tpu.core_type<tc>, window_params = [{transform_indices = @transform_0, window_bounds = array<i64: 2>}, {transform_indices = @transform_1, window_bounds = array<i64: 32, 128>}, {transform_indices = @transform_2, window_bounds = array<i64: 32, 128>}, {transform_indices = @transform_3, window_bounds = array<i64: 128, 128>}, {transform_indices = @transform_4, window_bounds = array<i64: 1, 128>}, {transform_indices = @transform_5, window_bounds = array<i64: 32, 128>}]} {
    %c0_i32 = arith.constant 0 : i32
    %0 = arith.cmpi eq, %arg1, %c0_i32 : i32
    %1 = arith.extui %0 : i1 to i32
    %c0_i32_0 = arith.constant 0 : i32
    %2 = arith.cmpi ne, %1, %c0_i32_0 : i32
    scf.if %2 {
      %c0_8 = arith.constant 0 : index
      %10 = memref.load %arg2[%c0_8] : memref<2xf32, #tpu.memory_space<smem>>
      %c1 = arith.constant 1 : index
      %11 = memref.load %arg2[%c1] : memref<2xf32, #tpu.memory_space<smem>>
      %c0_9 = arith.constant 0 : index
      %c0_10 = arith.constant 0 : index
      %12 = vector.load %arg4[%c0_9, %c0_10] : memref<32x128xf32, #tpu.memory_space<vmem>>, vector<32x128xf32>
      %cst_11 = arith.constant 1.000000e-07 : f32
      %13 = vector.broadcast %cst_11 : f32 to vector<32x128xf32>
      %14 = arith.addf %12, %13 : vector<32x128xf32>
      %cst_12 = arith.constant 1.000000e+00 : f32
      %15 = vector.broadcast %cst_12 : f32 to vector<32x128xf32>
      %16 = arith.subf %15, %12 : vector<32x128xf32>
      %cst_13 = arith.constant 1.000000e-07 : f32
      %17 = vector.broadcast %cst_13 : f32 to vector<32x128xf32>
      %18 = arith.addf %16, %17 : vector<32x128xf32>
      %19 = arith.mulf %14, %14 : vector<32x128xf32>
      %20 = arith.mulf %19, %19 : vector<32x128xf32>
      %21 = arith.mulf %20, %20 : vector<32x128xf32>
      %22 = arith.mulf %21, %19 : vector<32x128xf32>
      %23 = arith.mulf %18, %18 : vector<32x128xf32>
      %24 = arith.mulf %23, %23 : vector<32x128xf32>
      %25 = arith.mulf %24, %24 : vector<32x128xf32>
      %26 = arith.mulf %25, %23 : vector<32x128xf32>
      %27 = vector.broadcast %10 : f32 to vector<32x128xf32>
      %28 = arith.mulf %27, %22 : vector<32x128xf32>
      %29 = arith.addf %26, %28 : vector<32x128xf32>
      %30 = arith.divf %26, %29 : vector<32x128xf32>
      %c0_14 = arith.constant 0 : index
      %c0_15 = arith.constant 0 : index
      %31 = vector.load %arg3[%c0_14, %c0_15] : memref<32x128xf32, #tpu.memory_space<vmem>>, vector<32x128xf32>
      %32 = vector.broadcast %11 : f32 to vector<32x128xf32>
      %33 = arith.mulf %30, %32 : vector<32x128xf32>
      %34 = arith.mulf %31, %33 : vector<32x128xf32>
      %35 = arith.truncf %34 : vector<32x128xf32> to vector<32x128xbf16>
      %c0_16 = arith.constant 0 : index
      %c0_17 = arith.constant 0 : index
      %36 = vector.load %arg8[%c0_16, %c0_17] : memref<32x128xbf16, #tpu.memory_space<vmem>>, vector<32x128xbf16>
      tpu.vector_store %arg8[%c0_16, %c0_17], %35 {strides = array<i32>} : memref<32x128xbf16, #tpu.memory_space<vmem>>, vector<32x128xbf16>,
    } else {
    }
    %c0 = arith.constant 0 : index
    %c0_1 = arith.constant 0 : index
    %3 = vector.load %arg8[%c0, %c0_1] : memref<32x128xbf16, #tpu.memory_space<vmem>>, vector<32x128xbf16>
    %c0_2 = arith.constant 0 : index
    %c0_3 = arith.constant 0 : index
    %4 = vector.load %arg5[%c0_2, %c0_3] : memref<128x128xbf16, #tpu.memory_space<vmem>>, vector<128x128xbf16>
    %cst = arith.constant dense<0.000000e+00> : vector<32x128xf32>
    %5 = tpu.matmul %3, %4, %cst {dimension_numbers = #tpu.dot_dimension_numbers<[1], [0], [0], [1], [0, 0, 1, 1], [], []>} : vector<32x128xbf16>, vector<128x128xbf16>, vector<32x128xf32> -> vector<32x128xf32>
    %c0_4 = arith.constant 0 : index
    %c0_5 = arith.constant 0 : index
    %6 = vector.load %arg6[%c0_4, %c0_5] : memref<1x128xf32, #tpu.memory_space<vmem>>, vector<1x128xf32>
    %7 = vector.broadcast %6 : vector<1x128xf32> to vector<32x128xf32>
    %8 = arith.addf %5, %7 : vector<32x128xf32>
    %c0_6 = arith.constant 0 : index
    %c0_7 = arith.constant 0 : index
    %9 = vector.load %arg7[%c0_6, %c0_7] : memref<32x128xf32, #tpu.memory_space<vmem>>, vector<32x128xf32>
    tpu.vector_store %arg7[%c0_6, %c0_7], %8 {strides = array<i32>} : memref<32x128xf32, #tpu.memory_space<vmem>>, vector<32x128xf32>,
    return
  }
  func.func @transform_0(%arg0: i32, %arg1: i32) -> i32 {
    %c0_i32 = arith.constant 0 : i32
    %c0_i32_0 = arith.constant 0 : i32
    return %c0_i32 : i32
  }
  func.func @transform_1(%arg0: i32, %arg1: i32) -> (i32, i32) {
    %c0_i32 = arith.constant 0 : i32
    %c0_i32_0 = arith.constant 0 : i32
    return %arg0, %c0_i32 : i32, i32
  }
  func.func @transform_2(%arg0: i32, %arg1: i32) -> (i32, i32) {
    %c0_i32 = arith.constant 0 : i32
    %c0_i32_0 = arith.constant 0 : i32
    return %arg0, %c0_i32 : i32, i32
  }
  func.func @transform_3(%arg0: i32, %arg1: i32) -> (i32, i32) {
    %c0_i32 = arith.constant 0 : i32
    %c0_i32_0 = arith.constant 0 : i32
    return %c0_i32, %arg1 : i32, i32
  }
  func.func @transform_4(%arg0: i32, %arg1: i32) -> (i32, i32) {
    %c0_i32 = arith.constant 0 : i32
    %c0_i32_0 = arith.constant 0 : i32
    return %c0_i32, %arg1 : i32, i32
  }
  func.func @transform_5(%arg0: i32, %arg1: i32) -> (i32, i32) {
    %c0_i32 = arith.constant 0 : i32
    return %arg0, %arg1 : i32, i32
  }
}

</mosaic_0001>

<llo_original>
// kernel: tpu_custom_call.1
$region0: #{tpu_custom_call.1}
  #allocation0 [shape = 'u32[]', space=smem, size = 0x4, offset = 0x4, fixed_abs, tag = 'smem constant byte address 0x4 - core index']
  #allocation1 [shape = 'u32[144,128]{1,0:T(1,128)}', space=vmem, size = 0x12000, scoped, tag = 'internal scratch']
  #allocation2 [shape = 'bf16[32,128]{1,0:T(8,128)(2,1)}', space=vmem, size = 0x2000, scoped, tag = 'scratch operand']
  %s0 = inlined_call_operand.hbm [shape: f32[2], index: 0, kind: input, shape index: {}]
  %s1 = inlined_call_operand.hbm [shape: f32[256,128], index: 1, kind: input, shape index: {}]
  %s2 = inlined_call_operand.hbm [shape: f32[256,128], index: 2, kind: input, shape index: {}]
  %s3 = inlined_call_operand.hbm [shape: bf16[128,128], index: 3, kind: input, shape index: {}]
  %s4 = inlined_call_operand.vmem [shape: f32[1,128], index: 4, kind: input, shape index: {}]
  %s5 = inlined_call_operand.hbm [shape: f32[256,128], index: 5, kind: output, shape index: {}]
  %s6 = sld [smem:[#allocation0]]
  $region73: #{tpu_custom_call.1} parent=0
    _
  %s8 = ssub.s32 1, %s6
  %s9 = scalar_select 0, %s8, %s6
  $region1: #{tpu_custom_call.1} parent=0
    #allocation3 [shape = 'u8[512]{0}', space=smem, size = 0x200, scoped, tag = 'input window, operand 0, single buffered']
    #allocation4 [shape = 's32[2]{0}', space=sflag, size = 0x8, scoped, tag = 'scoped memory for tpu_custom_call.1']
    #allocation5 [shape = 's32[2]{0}', space=sflag, size = 0x8, scoped, tag = 'scoped memory for tpu_custom_call.1']
    #allocation6 [shape = 's32[2]{0}', space=sflag, size = 0x8, scoped, tag = 'scoped memory for tpu_custom_call.1']
    #allocation7 [shape = 'u8[32768]{0}', space=vmem, size = 0x8000, scoped, tag = 'input window, operand 1']
    #allocation8 [shape = 'u8[32768]{0}', space=vmem, size = 0x8000, scoped, tag = 'input window, operand 2']
    #allocation9 [shape = 's32[2]{0}', space=sflag, size = 0x8, scoped, tag = 'scoped memory for tpu_custom_call.1']
    #allocation10 [shape = 'u8[32768]{0}', space=vmem, size = 0x8000, scoped, tag = 'input window, operand 3, single buffered']
    #allocation11 [shape = 'u8[32768]{0}', space=vmem, size = 0x8000, scoped, tag = 'output window, operand 0']
    %10 = vsyncpa [#allocation6], 0
    %11 = vsyncpa [#allocation4], 0
    %s12 = scalar_lea.sflag [#allocation4], 1
    %13 = vsyncpa %s12, 0
    %14 = vsyncpa [#allocation9], 0
    %s15 = scalar_lea.sflag [#allocation9], 1
    %16 = vsyncpa %s15, 0
    %17 = vsyncpa [#allocation5], 0
    %s18 = scalar_lea.sflag [#allocation5], 1
    %19 = vsyncpa %s18, 0
    loop: start=0, step=1, limit=10
    $region2: #{tpu_custom_call.1} parent=1 // loop_pre_header
      _
    $region3: #{tpu_custom_call.1} parent=1 // loop_header
      %s21 = sphi 0, %s25
      %p22 = scmp.ge.s32.totalorder %s21, 10
      %s28 = sphi 0, %s40
      %s29 = sphi 0, %s36
      %s30 = sphi 0, %s28
      %s31 = sphi 0, %s29
      %s32 = sphi 0, %s30
      %s33 = sphi 0, %s31
      %s41 = sphi 0, %s41
      %s43 = sphi 0, %s41
      %s44 = sphi 0, %s43
      %s58 = sphi 0, %s44
      %s64 = sphi 0, %s66
      %s67 = sphi 0, %s64
      %s68 = sphi 0, %s67
      %s84 = sphi 0, %s68
      %s90 = sphi 0, %s92
      %s93 = sphi 0, %s90
      %s94 = sphi 0, %s93
      %s110 = sphi 0, %s94
      %s116 = sphi 0, %s118
      %s119 = sphi 0, %s116
      %s120 = sphi 0, %s119
      %s136 = sphi 0, %s120
      %s142 = sphi 0, %s144
      %s145 = sphi 0, %s142
      %s146 = sphi 0, %s145
      %s162 = sphi 0, %s146
      %s170 = sphi 0, %s172
      %s173 = sphi 0, %s170
      %s174 = sphi 0, %s173
      %s190 = sphi 0, %s174
    $region4: #{tpu_custom_call.1} parent=1 // loop_header_branch
      %24 = sbr.rel (%p22) target = $region8
    $region5: #{tpu_custom_call.1} parent=1 // loop_body
      %s26 = ssub.s32 %s21, 1
      %s27 = ssub.s32 %s21, 2
      %s34 = sadd.s32 1, %s29
      %p35 = scmp.ge.s32.totalorder %s34, 1
      %s36 = scalar_select %p35, 0, %s34
      %s37 = sadd.s32 1, %s28
      %s38 = scalar_select %p35, %s37, %s28
      %p39 = scmp.ge.s32.totalorder %s38, 8
      %s40 = scalar_select %p39, 0, %s38
      %s42 = sadd.s32 %s41, 1
      %p45 = scmp.eq.s32.totalorder %s21, 7
      %p46 = scmp.ne.s32.totalorder %s41, %s43
      %p47 = scmp.eq.s32.totalorder %s21, 0
      %p48 = por %p46, %p47
      %p49 = scmp.ne.s32.totalorder %s41, %s43
      %p50 = scmp.eq.s32.totalorder %s26, 7
      %p51 = por %p49, %p50
      %p52 = scmp.ne.s32.totalorder %s43, %s44
      %p53 = scmp.eq.s32.totalorder %s26, 0
      %p54 = por %p52, %p53
      %p55 = scmp.ne.s32.totalorder %s43, %s44
      %p56 = scmp.eq.s32.totalorder %s27, 7
      %p57 = por %p55, %p56
      %p59 = scmp.ne.s32.totalorder %s44, %s58
      %p60 = scmp.eq.s32.totalorder %s27, 0
      %p61 = por %p59, %p60
      %s62 = ssub.s32 %s28, %s40
      %p63 = scmp.eq.s32.totalorder %s62, 0
      %s65 = sadd.s32 %s64, 1
      %s66 = scalar_select %p63, %s64, %s65
      %p69 = pneg %p63
      %p70 = scmp.eq.s32.totalorder %s21, 7
      %p71 = por %p69, %p70
      %p72 = scmp.ne.s32.totalorder %s64, %s67
      %p73 = scmp.eq.s32.totalorder %s21, 0
      %p74 = por %p72, %p73
      %p75 = scmp.ne.s32.totalorder %s64, %s67
      %p76 = scmp.eq.s32.totalorder %s26, 7
      %p77 = por %p75, %p76
      %p78 = scmp.ne.s32.totalorder %s67, %s68
      %p79 = scmp.eq.s32.totalorder %s26, 0
      %p80 = por %p78, %p79
      %p81 = scmp.ne.s32.totalorder %s67, %s68
      %p82 = scmp.eq.s32.totalorder %s27, 7
      %p83 = por %p81, %p82
      %p85 = scmp.ne.s32.totalorder %s68, %s84
      %p86 = scmp.eq.s32.totalorder %s27, 0
      %p87 = por %p85, %p86
      %s88 = ssub.s32 %s28, %s40
      %p89 = scmp.eq.s32.totalorder %s88, 0
      %s91 = sadd.s32 %s90, 1
      %s92 = scalar_select %p89, %s90, %s91
      %p95 = pneg %p89
      %p96 = scmp.eq.s32.totalorder %s21, 7
      %p97 = por %p95, %p96
      %p98 = scmp.ne.s32.totalorder %s90, %s93
      %p99 = scmp.eq.s32.totalorder %s21, 0
      %p100 = por %p98, %p99
      %p101 = scmp.ne.s32.totalorder %s90, %s93
      %p102 = scmp.eq.s32.totalorder %s26, 7
      %p103 = por %p101, %p102
      %p104 = scmp.ne.s32.totalorder %s93, %s94
      %p105 = scmp.eq.s32.totalorder %s26, 0
      %p106 = por %p104, %p105
      %p107 = scmp.ne.s32.totalorder %s93, %s94
      %p108 = scmp.eq.s32.totalorder %s27, 7
      %p109 = por %p107, %p108
      %p111 = scmp.ne.s32.totalorder %s94, %s110
      %p112 = scmp.eq.s32.totalorder %s27, 0
      %p113 = por %p111, %p112
      %s114 = ssub.s32 %s29, %s36
      %p115 = scmp.eq.s32.totalorder %s114, 0
      %s117 = sadd.s32 %s116, 1
      %s118 = scalar_select %p115, %s116, %s117
      %p121 = pneg %p115
      %p122 = scmp.eq.s32.totalorder %s21, 7
      %p123 = por %p121, %p122
      %p124 = scmp.ne.s32.totalorder %s116, %s119
      %p125 = scmp.eq.s32.totalorder %s21, 0
      %p126 = por %p124, %p125
      %p127 = scmp.ne.s32.totalorder %s116, %s119
      %p128 = scmp.eq.s32.totalorder %s26, 7
      %p129 = por %p127, %p128
      %p130 = scmp.ne.s32.totalorder %s119, %s120
      %p131 = scmp.eq.s32.totalorder %s26, 0
      %p132 = por %p130, %p131
      %p133 = scmp.ne.s32.totalorder %s119, %s120
      %p134 = scmp.eq.s32.totalorder %s27, 7
      %p135 = por %p133, %p134
      %p137 = scmp.ne.s32.totalorder %s120, %s136
      %p138 = scmp.eq.s32.totalorder %s27, 0
      %p139 = por %p137, %p138
      %s140 = ssub.s32 %s29, %s36
      %p141 = scmp.eq.s32.totalorder %s140, 0
      %s143 = sadd.s32 %s142, 1
      %s144 = scalar_select %p141, %s142, %s143
      %p147 = pneg %p141
      %p148 = scmp.eq.s32.totalorder %s21, 7
      %p149 = por %p147, %p148
      %p150 = scmp.ne.s32.totalorder %s142, %s145
      %p151 = scmp.eq.s32.totalorder %s21, 0
      %p152 = por %p150, %p151
      %p153 = scmp.ne.s32.totalorder %s142, %s145
      %p154 = scmp.eq.s32.totalorder %s26, 7
      %p155 = por %p153, %p154
      %p156 = scmp.ne.s32.totalorder %s145, %s146
      %p157 = scmp.eq.s32.totalorder %s26, 0
      %p158 = por %p156, %p157
      %p159 = scmp.ne.s32.totalorder %s145, %s146
      %p160 = scmp.eq.s32.totalorder %s27, 7
      %p161 = por %p159, %p160
      %p163 = scmp.ne.s32.totalorder %s146, %s162
      %p164 = scmp.eq.s32.totalorder %s27, 0
      %p165 = por %p163, %p164
      %s166 = ssub.s32 %s28, %s40
      %s167 = ssub.s32 %s29, %s36
      %s168 = sor.u32 %s166, %s167
      %p169 = scmp.eq.s32.totalorder %s168, 0
      %s171 = sadd.s32 %s170, 1
      %s172 = scalar_select %p169, %s170, %s171
      %p175 = pneg %p169
      %p176 = scmp.eq.s32.totalorder %s21, 7
      %p177 = por %p175, %p176
      %p178 = scmp.ne.s32.totalorder %s170, %s173
      %p179 = scmp.eq.s32.totalorder %s21, 0
      %p180 = por %p178, %p179
      %p181 = scmp.ne.s32.totalorder %s170, %s173
      %p182 = scmp.eq.s32.totalorder %s26, 7
      %p183 = por %p181, %p182
      %p184 = scmp.ne.s32.totalorder %s173, %s174
      %p185 = scmp.eq.s32.totalorder %s26, 0
      %p186 = por %p184, %p185
      %p187 = scmp.ne.s32.totalorder %s173, %s174
      %p188 = scmp.eq.s32.totalorder %s27, 7
      %p189 = por %p187, %p188
      %p191 = scmp.ne.s32.totalorder %s174, %s190
      %p192 = scmp.eq.s32.totalorder %s27, 0
      %p193 = por %p191, %p192
      %p194 = scmp.le.s32.totalorder 1, %s21
      %p195 = scmp.lt.s32.totalorder %s21, 9
      %p196 = pnand %p194, %p195
      %p197 = pneg %p196
      // Predicated region
      $region9: #{tpu_custom_call.1} parent=5 // pred_check
        _
      $region10: #{tpu_custom_call.1} parent=5 // pred_check_branch
        %199 = sbr.rel (%p196) target = $region12
      $region11: #{tpu_custom_call.1} parent=5 // pred_region
        %s200 = ssub.s32 %s21, 1
        // Predicated region
        $region13: #{tpu_custom_call.1} parent=11 // pred_check
          %p201 = pneg %p54
        $region14: #{tpu_custom_call.1} parent=11 // pred_check_branch
          %203 = sbr.rel (%p201) target = $region16
        $region15: #{tpu_custom_call.1} parent=11 // pred_region
          %s205 = ssub.s32 16, 16
          %206 = vsyncadd [#allocation6], %s205
          %209 = dma.hbm_to_smem %s0, 16, [#allocation3], [#allocation6]
        $region16: #{tpu_custom_call.1} parent=11 // pred_fallthru
          _
        // Predicated region
        $region17: #{tpu_custom_call.1} parent=11 // pred_check
          %p210 = pneg %p132
        $region18: #{tpu_custom_call.1} parent=11 // pred_check_branch
          %212 = sbr.rel (%p210) target = $region20
        $region19: #{tpu_custom_call.1} parent=11 // pred_region
          %s214 = ssub.s32 1024, 1024
          %215 = vsyncadd [#allocation9], %s214
          %s216 = smul.addr %s31, 64
          %s217 = scalar_lea.hbm %s3, %s216
          %s218 = sshll.u32 [#allocation10], 4
          %s219 = int_to_ptr.vmem [resolvable:$true] %s218
          %224 = dma.hbm_to_vmem [thread:$0]  %s217, 1024, %s219, [#allocation9], 64, 64, 4
        $region20: #{tpu_custom_call.1} parent=11 // pred_fallthru
          _
        // Predicated region
        $region21: #{tpu_custom_call.1} parent=11 // pred_check
          %p225 = pneg %p158
        $region22: #{tpu_custom_call.1} parent=11 // pred_check_branch
          %227 = sbr.rel (%p225) target = $region24
        $region23: #{tpu_custom_call.1} parent=11 // pred_region
          %p228 = scmp.lt.s32.totalorder %s31, 0
          %s229 = scalar_select %p228, %s31, 0
          %s230 = scalar_lea.vmem %s4, %s229
        $region24: #{tpu_custom_call.1} parent=11 // pred_fallthru
          _
      $region12: #{tpu_custom_call.1} parent=5 // pred_fallthru
        _
      %p231 = scmp.lt.s32.totalorder %s21, 8
      // Predicated region
      $region25: #{tpu_custom_call.1} parent=5 // pred_check
        %p232 = pneg %p231
      $region26: #{tpu_custom_call.1} parent=5 // pred_check_branch
        %234 = sbr.rel (%p232) target = $region28
      $region27: #{tpu_custom_call.1} parent=5 // pred_region
        // Predicated region
        $region29: #{tpu_custom_call.1} parent=27 // pred_check
          %p235 = pneg %p74
        $region30: #{tpu_custom_call.1} parent=27 // pred_check_branch
          %237 = sbr.rel (%p235) target = $region32
        $region31: #{tpu_custom_call.1} parent=27 // pred_region
          %s238 = sand.u32 %s64, 1
          %s239 = scalar_lea.sflag [#allocation4], %s238
          %s240 = sand.u32 %s64, 1
          %s241 = smul.addr %s240, 32
          %s242 = scalar_lea.vmem [#allocation7], %s241
          %s243 = smul.u32 4, %s28
          %s245 = ssub.s32 512, 512
          %246 = vsyncadd %s239, %s245
          %s247 = smul.addr %s243, 128
          %s248 = scalar_lea.hbm %s1, %s247
          %s249 = sshll.u32 %s242, 4
          %s250 = int_to_ptr.vmem [resolvable:$true] %s249
          %255 = dma.hbm_to_vmem [thread:$0]  %s248, 512, %s250, %s239, 128, 128, 8
        $region32: #{tpu_custom_call.1} parent=27 // pred_fallthru
          _
        // Predicated region
        $region33: #{tpu_custom_call.1} parent=27 // pred_check
          %p256 = pneg %p100
        $region34: #{tpu_custom_call.1} parent=27 // pred_check_branch
          %258 = sbr.rel (%p256) target = $region36
        $region35: #{tpu_custom_call.1} parent=27 // pred_region
          %s259 = sand.u32 %s21, 1
          %s260 = scalar_lea.sflag [#allocation9], %s259
          %s261 = sand.u32 %s90, 1
          %s262 = smul.addr %s261, 32
          %s263 = scalar_lea.vmem [#allocation8], %s262
          %s264 = smul.u32 4, %s28
          %s266 = ssub.s32 512, 512
          %267 = vsyncadd %s260, %s266
          %s268 = smul.addr %s264, 128
          %s269 = scalar_lea.hbm %s2, %s268
          %s270 = sshll.u32 %s263, 4
          %s271 = int_to_ptr.vmem [resolvable:$true] %s270
          %276 = dma.hbm_to_vmem [thread:$0]  %s269, 512, %s271, %s260, 128, 128, 8
        $region36: #{tpu_custom_call.1} parent=27 // pred_fallthru
          _
      $region28: #{tpu_custom_call.1} parent=5 // pred_fallthru
        _
      %p277 = scmp.le.s32.totalorder 1, %s21
      %p278 = scmp.lt.s32.totalorder %s21, 9
      %p279 = pnand %p277, %p278
      %p280 = pneg %p279
      // Predicated region
      $region37: #{tpu_custom_call.1} parent=5 // pred_check
        _
      $region38: #{tpu_custom_call.1} parent=5 // pred_check_branch
        %282 = sbr.rel (%p279) target = $region40
      $region39: #{tpu_custom_call.1} parent=5 // pred_region
        %s283 = ssub.s32 %s21, 1
        // Predicated region
        $region41: #{tpu_custom_call.1} parent=39 // pred_check
          %p284 = pneg %p54
        $region42: #{tpu_custom_call.1} parent=39 // pred_check_branch
          %286 = sbr.rel (%p284) target = $region44
        $region43: #{tpu_custom_call.1} parent=39 // pred_region
          %287 = dma.done [#allocation6], 16
        $region44: #{tpu_custom_call.1} parent=39 // pred_fallthru
          _
        %s288 = sand.u32 %s67, 1
        %s289 = scalar_lea.sflag [#allocation4], %s288
        %s290 = sand.u32 %s67, 1
        %s291 = smul.addr %s290, 32
        %s292 = scalar_lea.vmem [#allocation7], %s291
        // Predicated region
        $region45: #{tpu_custom_call.1} parent=39 // pred_check
          %p293 = pneg %p80
        $region46: #{tpu_custom_call.1} parent=39 // pred_check_branch
          %295 = sbr.rel (%p293) target = $region48
        $region47: #{tpu_custom_call.1} parent=39 // pred_region
          %296 = dma.done %s289, 512
        $region48: #{tpu_custom_call.1} parent=39 // pred_fallthru
          _
        %s297 = sand.u32 %s26, 1
        %s298 = scalar_lea.sflag [#allocation9], %s297
        %s299 = sand.u32 %s93, 1
        %s300 = smul.addr %s299, 32
        %s301 = scalar_lea.vmem [#allocation8], %s300
        // Predicated region
        $region49: #{tpu_custom_call.1} parent=39 // pred_check
          %p302 = pneg %p106
        $region50: #{tpu_custom_call.1} parent=39 // pred_check_branch
          %304 = sbr.rel (%p302) target = $region52
        $region51: #{tpu_custom_call.1} parent=39 // pred_region
          %305 = dma.done %s298, 512
        $region52: #{tpu_custom_call.1} parent=39 // pred_fallthru
          _
        // Predicated region
        $region53: #{tpu_custom_call.1} parent=39 // pred_check
          %p306 = pneg %p132
        $region54: #{tpu_custom_call.1} parent=39 // pred_check_branch
          %308 = sbr.rel (%p306) target = $region56
        $region55: #{tpu_custom_call.1} parent=39 // pred_region
          %309 = dma.done [#allocation9], 1024
        $region56: #{tpu_custom_call.1} parent=39 // pred_fallthru
          _
        %310 = sfence
        %p311 = pneg %p54
        %p312 = pneg %p51
        %s313 = sand.u32 %s67, 1
        %s314 = scalar_lea.sflag [#allocation4], %s313
        %s315 = sand.u32 %s67, 1
        %s316 = smul.addr %s315, 32
        %s317 = scalar_lea.vmem [#allocation7], %s316
        %p318 = pneg %p80
        %p319 = pneg %p77
        %s320 = sand.u32 %s26, 1
        %s321 = scalar_lea.sflag [#allocation9], %s320
        %s322 = sand.u32 %s93, 1
        %s323 = smul.addr %s322, 32
        %s324 = scalar_lea.vmem [#allocation8], %s323
        %p325 = pneg %p106
        %p326 = pneg %p103
        %p327 = pneg %p132
        %p328 = pneg %p129
        %p329 = scmp.lt.s32.totalorder %s31, 0
        %s330 = scalar_select %p329, %s31, 0
        %s331 = scalar_lea.vmem %s4, %s330
        %p332 = pneg %p158
        %p333 = pneg %p155
        %p334 = pneg %p186
        %p335 = pneg %p183
        %s336 = sand.u32 %s173, 1
        %s337 = scalar_lea.sflag [#allocation5], %s336
        %s338 = sand.u32 %s173, 1
        %s339 = smul.addr %s338, 32
        %s340 = scalar_lea.vmem [#allocation11], %s339
        %s341 = smul.u32 4, %s30
        %s342 = smul.u32 4, %s30
        %p343 = scmp.lt.s32.totalorder %s31, 0
        %s344 = scalar_select %p343, %s31, 0
        %s345 = scalar_lea.vmem %s4, %s344
        %s346 = smul.u32 4, %s30
        %p348 = scmp.eq.s32.totalorder %s31, 0
        // Predicated region
        $region57: #{tpu_custom_call.1} parent=39 // pred_check
          %p349 = pneg %p348
        $region58: #{tpu_custom_call.1} parent=39 // pred_check_branch
          %351 = sbr.rel (%p349) target = $region60
        $region59: #{tpu_custom_call.1} parent=39 // pred_region
          %s352 = sld [smem:[#allocation3]]
          %s353 = sld [smem:[#allocation3 + $0x1]]
          %v354 = vld [vmem:[%s301] sm:$0xff]
          %v355 = vld [vmem:[%s301 + $0x8] sm:$0xff]
          %v356 = vld [vmem:[%s301 + $0x10] sm:$0xff]
          %v357 = vld [vmem:[%s301 + $0x18] sm:$0xff]
          %v358 = vadd.f32 %v354, 1e-07
          %v359 = vadd.f32 %v355, 1e-07
          %v360 = vadd.f32 %v356, 1e-07
          %v361 = vadd.f32 %v357, 1e-07
          %v362 = vsub.f32 1.0, %v354
          %v363 = vsub.f32 1.0, %v355
          %v364 = vsub.f32 1.0, %v356
          %v365 = vsub.f32 1.0, %v357
          %v366 = vadd.f32 %v362, 1e-07
          %v367 = vadd.f32 %v363, 1e-07
          %v368 = vadd.f32 %v364, 1e-07
          %v369 = vadd.f32 %v365, 1e-07
          %v370 = vmul.f32 %v358, %v358
          %v371 = vmul.f32 %v359, %v359
          %v372 = vmul.f32 %v360, %v360
          %v373 = vmul.f32 %v361, %v361
          %v374 = vmul.f32 %v370, %v370
          %v375 = vmul.f32 %v371, %v371
          %v376 = vmul.f32 %v372, %v372
          %v377 = vmul.f32 %v373, %v373
          %v378 = vmul.f32 %v374, %v374
          %v379 = vmul.f32 %v375, %v375
          %v380 = vmul.f32 %v376, %v376
          %v381 = vmul.f32 %v377, %v377
          %v382 = vmul.f32 %v378, %v370
          %v383 = vmul.f32 %v379, %v371
          %v384 = vmul.f32 %v380, %v372
          %v385 = vmul.f32 %v381, %v373
          %v386 = vmul.f32 %v366, %v366
          %v387 = vmul.f32 %v367, %v367
          %v388 = vmul.f32 %v368, %v368
          %v389 = vmul.f32 %v369, %v369
          %v390 = vmul.f32 %v386, %v386
          %v391 = vmul.f32 %v387, %v387
          %v392 = vmul.f32 %v388, %v388
          %v393 = vmul.f32 %v389, %v389
          %v394 = vmul.f32 %v390, %v390
          %v395 = vmul.f32 %v391, %v391
          %v396 = vmul.f32 %v392, %v392
          %v397 = vmul.f32 %v393, %v393
          %v398 = vmul.f32 %v394, %v386
          %v399 = vmul.f32 %v395, %v387
          %v400 = vmul.f32 %v396, %v388
          %v401 = vmul.f32 %v397, %v389
          %v402 = vstv %s352
          %v403 = vmul.f32 %v402, %v382
          %v404 = vmul.f32 %v402, %v383
          %v405 = vmul.f32 %v402, %v384
          %v406 = vmul.f32 %v402, %v385
          %v407 = vadd.f32 %v398, %v403
          %v408 = vadd.f32 %v399, %v404
          %v409 = vadd.f32 %v400, %v405
          %v410 = vadd.f32 %v401, %v406
          %v411 = vrcp.pop %v407
          %v412 = vmul.f32 %v398, %v411
          %v413 = vrcp.pop %v408
          %v414 = vmul.f32 %v399, %v413
          %v415 = vrcp.pop %v409
          %v416 = vmul.f32 %v400, %v415
          %v417 = vrcp.pop %v410
          %v418 = vmul.f32 %v401, %v417
          %v419 = vld [vmem:[%s292] sm:$0xff]
          %v420 = vld [vmem:[%s292 + $0x8] sm:$0xff]
          %v421 = vld [vmem:[%s292 + $0x10] sm:$0xff]
          %v422 = vld [vmem:[%s292 + $0x18] sm:$0xff]
          %v423 = vstv %s353
          %v424 = vmul.f32 %v412, %v423
          %v425 = vmul.f32 %v414, %v423
          %v426 = vmul.f32 %v416, %v423
          %v427 = vmul.f32 %v418, %v423
          %v428 = vmul.f32 %v419, %v424
          %v429 = vmul.f32 %v420, %v425
          %v430 = vmul.f32 %v421, %v426
          %v431 = vmul.f32 %v422, %v427
          %v432 = vpack.c.bf16 %v429, %v428
          %v433 = vpack.c.bf16 %v431, %v430
          %v436 = vunpack.c.l.b16 %v432
          %v437 = vunpack.c.h.b16 %v432
          %v438 = vunpack.c.l.b16 %v433
          %v439 = vunpack.c.h.b16 %v433
          %v440 = vpack.c.b16 %v436, %v436
          %v441 = vpack.c.b16 %v437, %v437
          %v442 = vpack.c.b16 %v438, %v438
          %v443 = vpack.c.b16 %v439, %v439
          %448 = vst [vmem:[#allocation2] sm:$0xf] %v440
          %449 = vst [vmem:[#allocation2 + $0x4] sm:$0xf] %v441
          %450 = vst [vmem:[#allocation2 + $0x8] sm:$0xf] %v442
          %451 = vst [vmem:[#allocation2 + $0xc] sm:$0xf] %v443
        $region60: #{tpu_custom_call.1} parent=39 // pred_fallthru
          _
        %v452 = vld [vmem:[#allocation2] sm:$0xf]
        %v453 = vld [vmem:[#allocation2 + $0x4] sm:$0xf]
        %v454 = vld [vmem:[#allocation2 + $0x8] sm:$0xf]
        %v455 = vld [vmem:[#allocation2 + $0xc] sm:$0xf]
        %v456 = vld [vmem:[#allocation10] sm:$0xf]
        %v457 = vld [vmem:[#allocation10 + $0x4] sm:$0xf]
        %v458 = vld [vmem:[#allocation10 + $0x8] sm:$0xf]
        %v459 = vld [vmem:[#allocation10 + $0xc] sm:$0xf]
        %v460 = vld [vmem:[#allocation10 + $0x10] sm:$0xf]
        %v461 = vld [vmem:[#allocation10 + $0x14] sm:$0xf]
        %v462 = vld [vmem:[#allocation10 + $0x18] sm:$0xf]
        %v463 = vld [vmem:[#allocation10 + $0x1c] sm:$0xf]
        %v464 = vld [vmem:[#allocation10 + $0x20] sm:$0xf]
        %v465 = vld [vmem:[#allocation10 + $0x24] sm:$0xf]
        %v466 = vld [vmem:[#allocation10 + $0x28] sm:$0xf]
        %v467 = vld [vmem:[#allocation10 + $0x2c] sm:$0xf]
        %v468 = vld [vmem:[#allocation10 + $0x30] sm:$0xf]
        %v469 = vld [vmem:[#allocation10 + $0x34] sm:$0xf]
        %v470 = vld [vmem:[#allocation10 + $0x38] sm:$0xf]
        %v471 = vld [vmem:[#allocation10 + $0x3c] sm:$0xf]
        %v472 = vld [vmem:[%s345] sm:$0x1]
        %v474 = vlaneseq
        %v475 = vshrl.u32 %v474, 7
        %v476 = vsub.s32 0, %v475
        %v477 = vrot.slane %v472, %v476
        %v483 = vunpack.c.l.b16 %v452
        %v484 = vunpack.c.l.b16 %v453
        %v485 = vunpack.c.l.b16 %v454
        %v486 = vunpack.c.l.b16 %v455
        %v487 = vpack.c.b16 %v484, %v483
        %v488 = vpack.c.b16 %v486, %v485
        %v507 = vunpack.c.l.b16 %v456
        %v508 = vunpack.c.l.b16 %v457
        %v509 = vunpack.c.l.b16 %v458
        %v510 = vunpack.c.l.b16 %v459
        %v511 = vunpack.c.l.b16 %v460
        %v512 = vunpack.c.l.b16 %v461
        %v513 = vunpack.c.l.b16 %v462
        %v514 = vunpack.c.l.b16 %v463
        %v515 = vunpack.c.l.b16 %v464
        %v516 = vunpack.c.l.b16 %v465
        %v517 = vunpack.c.l.b16 %v466
        %v518 = vunpack.c.l.b16 %v467
        %v519 = vunpack.c.l.b16 %v468
        %v520 = vunpack.c.l.b16 %v469
        %v521 = vunpack.c.l.b16 %v470
        %v522 = vunpack.c.l.b16 %v471
        %v523 = vpack.c.b16 %v508, %v507
        %v524 = vpack.c.b16 %v510, %v509
        %v525 = vpack.c.b16 %v512, %v511
        %v526 = vpack.c.b16 %v514, %v513
        %v527 = vpack.c.b16 %v516, %v515
        %v528 = vpack.c.b16 %v518, %v517
        %v529 = vpack.c.b16 %v520, %v519
        %v530 = vpack.c.b16 %v522, %v521
        %539 = vmatprep.subr.bf16.mxu0 0
        %540 = vmatpush1.bf16.msra.mxu0 %v530
        %541 = vmatprep.subr.bf16.mxu0 0
        %542 = vmatpush1.bf16.msra.mxu0 %v529
        %543 = vmatprep.subr.bf16.mxu0 0
        %544 = vmatpush1.bf16.msra.mxu0 %v528
        %545 = vmatprep.subr.bf16.mxu0 0
        %546 = vmatpush1.bf16.msra.mxu0 %v527
        %547 = vmatprep.subr.bf16.mxu0 0
        %548 = vmatpush1.bf16.msra.mxu0 %v526
        %549 = vmatprep.subr.bf16.mxu0 0
        %550 = vmatpush1.bf16.msra.mxu0 %v525
        %551 = vmatprep.subr.bf16.mxu0 0
        %552 = vmatpush1.bf16.msra.mxu0 %v524
        %553 = vmatprep.subr.bf16.mxu0 0
        %554 = vmatpush1.bf16.msra.mxu0 %v523
        %555 = vmatprep.subr.bf16.mxu0 0
        %556 = vmatpush2.bf16.msra.mxu0 0
        %557 = vmatprep.subr.bf16.mxu0 0
        %558 = vmatpush2.bf16.msra.mxu0 0
        %559 = vmatprep.subr.bf16.mxu0 0
        %560 = vmatpush2.bf16.msra.mxu0 0
        %561 = vmatprep.subr.bf16.mxu0 0
        %562 = vmatpush2.bf16.msra.mxu0 0
        %563 = vmatprep.subr.bf16.mxu0 0
        %564 = vmatpush2.bf16.msra.mxu0 0
        %565 = vmatprep.subr.bf16.mxu0 0
        %566 = vmatpush2.bf16.msra.mxu0 0
        %567 = vmatprep.subr.bf16.mxu0 0
        %568 = vmatpush2.bf16.msra.mxu0 0
        %569 = vmatprep.subr.bf16.mxu0 0
        %570 = vmatpush2.bf16.msra.mxu0 0
        %571 = vmatprep.mubr.bf16.mxu0 0
        %572 = vmatmul.mubr.bf16.gmra.mxu0 %v487
        %v573 = vpop.f32.mrf.mxu0
        %v574 = vadd.f32 %v477, %v573
        %v575 = vpop.f32.mrf.mxu0
        %v576 = vpop.f32.mrf.mxu0
        %v577 = vadd.f32 %v477, %v576
        %v578 = vpop.f32.mrf.mxu0
        %579 = vmatprep.mubr.bf16.mxu0 0
        %580 = vmatmul.mubr.bf16.gmra.mxu0 %v488
        %v581 = vpop.f32.mrf.mxu0
        %v582 = vadd.f32 %v477, %v581
        %v583 = vpop.f32.mrf.mxu0
        %v584 = vpop.f32.mrf.mxu0
        %v585 = vadd.f32 %v477, %v584
        %v586 = vpop.f32.mrf.mxu0
        %587 = vdwg.mxu0
        %588 = vst [vmem:[%s340] sm:$0xff] %v574
        %589 = vst [vmem:[%s340 + $0x8] sm:$0xff] %v577
        %590 = vst [vmem:[%s340 + $0x10] sm:$0xff] %v582
        %591 = vst [vmem:[%s340 + $0x18] sm:$0xff] %v585
        %s592 = sand.u32 %s173, 1
        %s593 = scalar_lea.sflag [#allocation5], %s592
        %s594 = sand.u32 %s173, 1
        %s595 = smul.addr %s594, 32
        %s596 = scalar_lea.vmem [#allocation11], %s595
        // Predicated region
        $region61: #{tpu_custom_call.1} parent=39 // pred_check
          %p597 = pneg %p183
        $region62: #{tpu_custom_call.1} parent=39 // pred_check_branch
          %599 = sbr.rel (%p597) target = $region64
        $region63: #{tpu_custom_call.1} parent=39 // pred_region
          %s600 = smul.u32 4, %s30
          %s602 = ssub.s32 512, 512
          %603 = vsyncadd %s593, %s602
          %s604 = sadd.s32 %s31, %s600
          %s605 = smul.addr %s604, 128
          %s606 = scalar_lea.hbm %s5, %s605
          %s607 = sshll.u32 %s596, 4
          %s608 = int_to_ptr.vmem [resolvable:$true] %s607
          %613 = dma.vmem_to_hbm [thread:$0]  %s608, 512, %s606, %s593, 128, 128, 8
        $region64: #{tpu_custom_call.1} parent=39 // pred_fallthru
          _
      $region40: #{tpu_custom_call.1} parent=5 // pred_fallthru
        _
      %p614 = scmp.le.s32.totalorder 2, %s21
      // Predicated region
      $region65: #{tpu_custom_call.1} parent=5 // pred_check
        %p615 = pneg %p614
      $region66: #{tpu_custom_call.1} parent=5 // pred_check_branch
        %617 = sbr.rel (%p615) target = $region68
      $region67: #{tpu_custom_call.1} parent=5 // pred_region
        %s618 = ssub.s32 %s21, 2
        // Predicated region
        $region69: #{tpu_custom_call.1} parent=67 // pred_check
          %p619 = pneg %p189
        $region70: #{tpu_custom_call.1} parent=67 // pred_check_branch
          %621 = sbr.rel (%p619) target = $region72
        $region71: #{tpu_custom_call.1} parent=67 // pred_region
          %s622 = sand.u32 %s174, 1
          %s623 = scalar_lea.sflag [#allocation5], %s622
          %s624 = sand.u32 %s174, 1
          %s625 = smul.addr %s624, 32
          %s626 = scalar_lea.vmem [#allocation11], %s625
          %627 = dma.done %s623, 512
        $region72: #{tpu_custom_call.1} parent=67 // pred_fallthru
          _
      $region68: #{tpu_custom_call.1} parent=5 // pred_fallthru
        _
    $region6: #{tpu_custom_call.1} parent=1 // loop_footer
      %s25 = sadd.s32 1, %s21
    $region7: #{tpu_custom_call.1} parent=1 // loop_footer_branch
      %20 = sbr.rel target = $region3
    $region8: #{tpu_custom_call.1} parent=1 // loop_exit
      _
    %628 = vsyncpa [#allocation4], 1
    %s629 = scalar_lea.sflag [#allocation4], 1
    %630 = vsyncpa %s629, 1
    %631 = vsyncpa [#allocation9], 1
    %s632 = scalar_lea.sflag [#allocation9], 1
    %633 = vsyncpa %s632, 1
    %634 = vsyncpa [#allocation5], 1
    %s635 = scalar_lea.sflag [#allocation5], 1
    %636 = vsyncpa %s635, 1
    %637 = vsyncpa [#allocation6], 1
    %s638 = scalar_lea.sflag [#allocation6], 1
    %639 = vsyncpa %s638, 1

</llo_original>
